<compile_context>
chip_gen: v6e
topology: v6e:2x2x1
jax: 0.10.0
libtpu: 0.0.40
codegen_flags: <defaults>
</compile_context>

<pallas_src>
import functools

import jax
import jax.numpy as jnp
from jax import lax
from jax.experimental import pallas as pl
from jax.experimental.pallas import tpu as pltpu

_LANES = 128
_SUBLANES = 8


def _gdi_bl_kernel(pred_ref, gt_ref, dist_ref, out_ref, *, rows_chunk, approx):
    # pred_ref: (Bt, 2, rows_blk, 128)  logits, native dtype
    # gt_ref:   (Bt, rows_blk, 128)     integer labels in {0, 1}, native dtype
    # dist_ref: (Bt, 1, rows_blk, 128)  dist_map channel 1 only, native dtype
    # out_ref:  (Bt, 4, rows_chunk, 128) f32 accumulator, resident across the
    #           spatial grid axis:
    #           row 0 = sum(onehot1), 1 = sum(p1), 2 = sum(p1*onehot1),
    #           row 3 = sum(p1*dist1)
    @pl.when(pl.program_id(2) == 0)
    def _():
        out_ref[...] = jnp.zeros_like(out_ref)

    bt = pred_ref.shape[0]
    rows_blk = pred_ref.shape[2]
    n_chunks = rows_blk // rows_chunk

    def chunk_partials(sl):
        l0 = pred_ref[:, 0, sl, :].astype(jnp.float32)
        l1 = pred_ref[:, 1, sl, :].astype(jnp.float32)
        g = gt_ref[:, sl, :]
        d1 = dist_ref[:, 0, sl, :].astype(jnp.float32)
        # Two-class softmax == sigmoid of the logit difference (exp -> EUP).
        z = 1.0 + jnp.exp(l0 - l1)
        p1 = pl.reciprocal(z, approx=True) if approx else 1.0 / z
        t1 = (g == 1).astype(jnp.float32)
        return t1, p1, p1 * t1, p1 * d1

    if n_chunks == 1:
        # Tiny blocks (rows_blk <= 8): static full-slice, no loop needed.
        acc_tc, acc_p1, acc_in, acc_bl = chunk_partials(slice(None))
    else:
        def body(c, carry):
            r0 = pl.multiple_of(c * rows_chunk, rows_chunk)
            parts = chunk_partials(pl.ds(r0, rows_chunk))
            return tuple(a + p for a, p in zip(carry, parts))

        zero = jnp.zeros((bt, rows_chunk, _LANES), jnp.float32)
        acc_tc, acc_p1, acc_in, acc_bl = lax.fori_loop(
            0, n_chunks, body, (zero, zero, zero, zero),
            unroll=min(8, n_chunks))

    # Each quantity owns a full (rows_chunk, 128) tile -> unmasked stores.
    out_ref[:, 0, :, :] += acc_tc
    out_ref[:, 1, :, :] += acc_p1
    out_ref[:, 2, :, :] += acc_in
    out_ref[:, 3, :, :] += acc_bl


def _pick_rows_blk(rows, cap=512):
    # Largest power-of-two divisor of `rows` that is <= cap (~64K elems/step).
    for cand in (512, 256, 128, 64, 32, 16, 8, 4, 2, 1):
        if cand <= cap and cand <= rows and rows % cand == 0:
            return cand
    return rows


def gdi_bl_partials(pred_r, gt_r, dist_r, *, block_b=1, rows_blk=None,
                    spatial_splits=1, approx=False):
    """pred_r: (B, 2, R, 128), gt_r: (B, R, 128) int, dist_r: (B, 2, R, 128).
    Returns (B, spatial_splits*4, rows_chunk, 128) f32 partial sums and
    rows_chunk."""
    B, K, R, L = pred_r.shape
    assert K == 2 and L == _LANES
    assert gt_r.shape == (B, R, L)
    assert dist_r.shape == (B, K, R, L)
    assert B % block_b == 0
    assert R % spatial_splits == 0
    r_split = R // spatial_splits
    if rows_blk is None:
        rows_blk = _pick_rows_blk(r_split)
    assert r_split % rows_blk == 0
    rows_chunk = min(_SUBLANES, rows_blk)
    assert rows_blk % rows_chunk == 0
    nhb = r_split // rows_blk
    grid = (B // block_b, spatial_splits, nhb)

    pred_spec = pl.BlockSpec((block_b, K, rows_blk, _LANES),
                             lambda b, s, h: (b, 0, s * nhb + h, 0))
    gt_spec = pl.BlockSpec((block_b, rows_blk, _LANES),
                           lambda b, s, h: (b, s * nhb + h, 0))
    # Only DMA channel 1 of dist_map (block size 1 along channels, index 1).
    dist_spec = pl.BlockSpec((block_b, 1, rows_blk, _LANES),
                             lambda b, s, h: (b, 1, s * nhb + h, 0))
    # Resident accumulator across the spatial ("arbitrary") axis.
    out_spec = pl.BlockSpec((block_b, 4, rows_chunk, _LANES),
                            lambda b, s, h: (b, s, 0, 0))

    kernel = functools.partial(_gdi_bl_kernel, rows_chunk=rows_chunk,
                               approx=approx)
    out = pl.pallas_call(
        kernel,
        out_shape=jax.ShapeDtypeStruct(
            (B, 4 * spatial_splits, rows_chunk, _LANES), jnp.float32),
        grid_spec=pltpu.PrefetchScalarGridSpec(
            num_scalar_prefetch=0,
            grid=grid,
            in_specs=[pred_spec, gt_spec, dist_spec],
            out_specs=out_spec),
        compiler_params=pltpu.CompilerParams(
            dimension_semantics=("parallel", "parallel", "arbitrary")),
    )(pred_r, gt_r, dist_r)
    return out, rows_chunk


def gdi_bl_loss(pred, gt, dist_map, alpha=0.01, *, block_b=1, rows_blk=None,
                spatial_splits=1, approx=False):
    """pred: (B, 2, H, W) logits, gt: (B, H, W) int labels in {0, 1},
    dist_map: (B, 2, H, W) signed distance maps."""
    B, K, H, W = pred.shape
    assert K == 2
    HW = H * W
    assert HW % _LANES == 0, "H*W must be a multiple of 128"
    R = HW // _LANES
    # Reshapes only (free on contiguous layouts); no dtype upcast in HBM —
    # bf16 logits/dist and int8 labels are streamed as-is.
    pred_r = pred.reshape(B, K, R, _LANES)
    dist_r = dist_map.reshape(B, K, R, _LANES)
    gt_r = gt.reshape(B, R, _LANES)

    part, rows_chunk = gdi_bl_partials(
        pred_r, gt_r, dist_r, block_b=block_b, rows_blk=rows_blk,
        spatial_splits=spatial_splits, approx=approx)
    part = part.reshape(B, spatial_splits, 4, rows_chunk, _LANES)
    sums = jnp.sum(part, axis=(1, 3, 4))                       # (B, 4)
    tc1, pc1, inter1, bl1 = sums[:, 0], sums[:, 1], sums[:, 2], sums[:, 3]

    # Channel-0 identities assume every gt label is exactly 0 or 1 (as
    # class2one_hot(K=2) requires); ignore labels would be counted as class 0.
    hw = jnp.float32(HW)
    tc0 = hw - tc1
    pc0 = hw - pc1
    # TODO(synk): inter0 is a difference of O(HW) f32 terms; for multi-
    # megapixel inputs accumulate channel-0 partials in-kernel if tighter
    # tolerance is needed.
    inter0 = hw - pc1 - tc1 + inter1

    tc_sum = jnp.stack([tc0, tc1], axis=1)       # einsum('bkwh->bk', onehot)
    pc_sum = jnp.stack([pc0, pc1], axis=1)       # einsum('bkwh->bk', probs)
    inter = jnp.stack([inter0, inter1], axis=1)  # einsum('bkwh,bkwh->bk', ...)

    # GeneralizedDice (idc=[0, 1] -> all channels)
    w = 1.0 / (tc_sum + 1e-10) ** 2
    intersection = w * inter
    union = w * (pc_sum + tc_sum)
    divided = 1.0 - 2.0 * (jnp.sum(intersection, axis=1) + 1e-10) / (
        jnp.sum(union, axis=1) + 1e-10)
    loss_gdi = jnp.mean(divided)

    # BoundaryLoss (idc=[1]): mean over (B, 1, H, W) of probs[:,1]*dist[:,1]
    loss_bl = jnp.sum(bl1) / (B * 1 * HW)

    return (1.0 - alpha) * loss_gdi + alpha * loss_bl


def _reference_loss(pred, gt, dist_map, alpha=0.01):
    """Pure-JAX reference reproducing the PyTorch forward."""
    probs = jax.nn.softmax(pred.astype(jnp.float32), axis=1)
    K = pred.shape[1]
    tc = jax.nn.one_hot(gt, K, axis=1, dtype=jnp.float32)      # (B,K,H,W)
    pc = probs
    w = 1.0 / (jnp.einsum('bkwh->bk', tc) + 1e-10) ** 2
    inter = w * jnp.einsum('bkwh,bkwh->bk', pc, tc)
    union = w * (jnp.einsum('bkwh->bk', pc) + jnp.einsum('bkwh->bk', tc))
    divided = 1.0 - 2.0 * (jnp.einsum('bk->b', inter) + 1e-10) / (
        jnp.einsum('bk->b', union) + 1e-10)
    loss_gdi = jnp.mean(divided)
    loss_bl = jnp.mean(probs[:, 1:2] * dist_map.astype(jnp.float32)[:, 1:2])
    return (1.0 - alpha) * loss_gdi + alpha * loss_bl


if __name__ == "__main__":
    key = jax.random.PRNGKey(0)
    k1, k2, k3, k4, k5, k6 = jax.random.split(key, 6)

    # Small smoke test: B=2, K=2, H=W=16, f32 / int32 inputs.
    B, K, H, W = 2, 2, 16, 16
    pred = jax.random.normal(k1, (B, K, H, W), dtype=jnp.float32)
    gt = jax.random.randint(k2, (B, H, W), 0, K, dtype=jnp.int32)
    dist_map = jax.random.normal(k3, (B, K, H, W), dtype=jnp.float32) * 3.0
    loss = jax.block_until_ready(gdi_bl_loss(pred, gt, dist_map))
    ref = jax.block_until_ready(_reference_loss(pred, gt, dist_map))
    assert jnp.allclose(loss, ref, atol=1e-5, rtol=1e-4), (loss, ref)

    # Byte-lean test: bf16 logits/dist, int8 labels, B=1 with a 2-way spatial
    # split (keeps both v7x TensorCores busy); exercises the fori_loop fold
    # (rows_blk=64, rows_chunk=8, n_chunks=8).
    B2, H2, W2 = 1, 128, 128
    pred2 = jax.random.normal(k4, (B2, K, H2, W2), dtype=jnp.bfloat16)
    gt2 = jax.random.randint(k5, (B2, H2, W2), 0, K,
                             dtype=jnp.int32).astype(jnp.int8)
    dist2 = (jax.random.normal(k6, (B2, K, H2, W2), dtype=jnp.float32)
             * 3.0).astype(jnp.bfloat16)
    loss2 = jax.block_until_ready(gdi_bl_loss(pred2, gt2, dist2,
                                              spatial_splits=2))
    ref2 = jax.block_until_ready(_reference_loss(pred2, gt2, dist2))
    assert jnp.allclose(loss2, ref2, atol=1e-4, rtol=1e-4), (loss2, ref2)

    print("KERNEL_OK")
</pallas_src>

<mosaic_0001>
module attributes {stable_mosaic.version = 11 : i64} {
  func.func @_gdi_bl_kernel(%arg0: i32, %arg1: i32, %arg2: i32, %arg3: memref<1x2x2x128xf32, #tpu.memory_space<vmem>>, %arg4: memref<1x2x128xi32, #tpu.memory_space<vmem>>, %arg5: memref<1x1x2x128xf32, #tpu.memory_space<vmem>>, %arg6: memref<1x4x2x128xf32, #tpu.memory_space<vmem>>) attributes {dimension_semantics = [#tpu.dimension_semantics<parallel>, #tpu.dimension_semantics<parallel>, #tpu.dimension_semantics<arbitrary>], iteration_bounds = array<i64: 2, 1, 1>, scalar_prefetch = 0 : i64, scratch_operands = 0 : i64, tpu.core_type = #tpu.core_type<tc>, window_params = [{transform_indices = @transform_0, window_bounds = array<i64: 1, 2, 2, 128>}, {transform_indices = @transform_1, window_bounds = array<i64: 1, 2, 128>}, {transform_indices = @transform_2, window_bounds = array<i64: 1, 1, 2, 128>}, {transform_indices = @transform_3, window_bounds = array<i64: 1, 4, 2, 128>}]} {
    %c0_i32 = arith.constant 0 : i32
    %0 = arith.cmpi eq, %arg2, %c0_i32 : i32
    %1 = arith.extui %0 : i1 to i32
    %c0_i32_0 = arith.constant 0 : i32
    %2 = arith.cmpi ne, %1, %c0_i32_0 : i32
    scf.if %2 {
      %cst_45 = arith.constant 0.000000e+00 : f32
      %46 = vector.broadcast %cst_45 : f32 to vector<1x4x2x128xf32>
      %c0_46 = arith.constant 0 : index
      %c0_47 = arith.constant 0 : index
      %c0_48 = arith.constant 0 : index
      %c0_49 = arith.constant 0 : index
      %47 = vector.load %arg6[%c0_46, %c0_47, %c0_48, %c0_49] : memref<1x4x2x128xf32, #tpu.memory_space<vmem>>, vector<1x4x2x128xf32>
      tpu.vector_store %arg6[%c0_46, %c0_47, %c0_48, %c0_49], %46 {strides = array<i32>} : memref<1x4x2x128xf32, #tpu.memory_space<vmem>>, vector<1x4x2x128xf32>,
    } else {
    }
    %c0 = arith.constant 0 : index
    %c0_1 = arith.constant 0 : index
    %c0_2 = arith.constant 0 : index
    %c0_3 = arith.constant 0 : index
    %3 = vector.load %arg3[%c0, %c0_1, %c0_2, %c0_3] : memref<1x2x2x128xf32, #tpu.memory_space<vmem>>, vector<1x1x2x128xf32>
    %4 = vector.shape_cast %3 : vector<1x1x2x128xf32> to vector<1x2x128xf32>
    %c0_4 = arith.constant 0 : index
    %c1 = arith.constant 1 : index
    %c0_5 = arith.constant 0 : index
    %c0_6 = arith.constant 0 : index
    %5 = vector.load %arg3[%c0_4, %c1, %c0_5, %c0_6] : memref<1x2x2x128xf32, #tpu.memory_space<vmem>>, vector<1x1x2x128xf32>
    %6 = vector.shape_cast %5 : vector<1x1x2x128xf32> to vector<1x2x128xf32>
    %c0_7 = arith.constant 0 : index
    %c0_8 = arith.constant 0 : index
    %c0_9 = arith.constant 0 : index
    %7 = vector.load %arg4[%c0_7, %c0_8, %c0_9] : memref<1x2x128xi32, #tpu.memory_space<vmem>>, vector<1x2x128xi32>
    %c0_10 = arith.constant 0 : index
    %c0_11 = arith.constant 0 : index
    %c0_12 = arith.constant 0 : index
    %c0_13 = arith.constant 0 : index
    %8 = vector.load %arg5[%c0_10, %c0_11, %c0_12, %c0_13] : memref<1x1x2x128xf32, #tpu.memory_space<vmem>>, vector<1x1x2x128xf32>
    %9 = vector.shape_cast %8 : vector<1x1x2x128xf32> to vector<1x2x128xf32>
    %10 = arith.subf %4, %6 : vector<1x2x128xf32>
    %11 = math.exp %10 : vector<1x2x128xf32>
    %cst = arith.constant 1.000000e+00 : f32
    %12 = vector.broadcast %cst : f32 to vector<1x2x128xf32>
    %13 = arith.addf %12, %11 : vector<1x2x128xf32>
    %cst_14 = arith.constant 1.000000e+00 : f32
    %14 = vector.broadcast %cst_14 : f32 to vector<1x2x128xf32>
    %15 = arith.divf %14, %13 : vector<1x2x128xf32>
    %c1_i32 = arith.constant 1 : i32
    %16 = vector.broadcast %c1_i32 : i32 to vector<1x2x128xi32>
    %17 = arith.cmpi eq, %7, %16 : vector<1x2x128xi32>
    %18 = arith.extui %17 : vector<1x2x128xi1> to vector<1x2x128xi32>
    %19 = arith.sitofp %18 : vector<1x2x128xi32> to vector<1x2x128xf32>
    %20 = arith.mulf %15, %19 : vector<1x2x128xf32>
    %21 = arith.mulf %15, %9 : vector<1x2x128xf32>
    %c0_15 = arith.constant 0 : index
    %c0_16 = arith.constant 0 : index
    %c0_17 = arith.constant 0 : index
    %c0_18 = arith.constant 0 : index
    %22 = vector.load %arg6[%c0_15, %c0_16, %c0_17, %c0_18] : memref<1x4x2x128xf32, #tpu.memory_space<vmem>>, vector<1x1x2x128xf32>
    %23 = vector.shape_cast %22 : vector<1x1x2x128xf32> to vector<1x2x128xf32>
    %24 = arith.addf %23, %19 : vector<1x2x128xf32>
    %c0_19 = arith.constant 0 : index
    %c0_20 = arith.constant 0 : index
    %c0_21 = arith.constant 0 : index
    %c0_22 = arith.constant 0 : index
    %25 = vector.load %arg6[%c0_19, %c0_20, %c0_21, %c0_22] : memref<1x4x2x128xf32, #tpu.memory_space<vmem>>, vector<1x1x2x128xf32>
    %26 = vector.shape_cast %25 : vector<1x1x2x128xf32> to vector<1x2x128xf32>
    %27 = vector.shape_cast %24 : vector<1x2x128xf32> to vector<1x1x2x128xf32>
    tpu.vector_store %arg6[%c0_19, %c0_20, %c0_21, %c0_22], %27 {strides = array<i32>} : memref<1x4x2x128xf32, #tpu.memory_space<vmem>>, vector<1x1x2x128xf32>,
    %c0_23 = arith.constant 0 : index
    %c1_24 = arith.constant 1 : index
    %c0_25 = arith.constant 0 : index
    %c0_26 = arith.constant 0 : index
    %28 = vector.load %arg6[%c0_23, %c1_24, %c0_25, %c0_26] : memref<1x4x2x128xf32, #tpu.memory_space<vmem>>, vector<1x1x2x128xf32>
    %29 = vector.shape_cast %28 : vector<1x1x2x128xf32> to vector<1x2x128xf32>
    %30 = arith.addf %29, %15 : vector<1x2x128xf32>
    %c0_27 = arith.constant 0 : index
    %c1_28 = arith.constant 1 : index
    %c0_29 = arith.constant 0 : index
    %c0_30 = arith.constant 0 : index
    %31 = vector.load %arg6[%c0_27, %c1_28, %c0_29, %c0_30] : memref<1x4x2x128xf32, #tpu.memory_space<vmem>>, vector<1x1x2x128xf32>
    %32 = vector.shape_cast %31 : vector<1x1x2x128xf32> to vector<1x2x128xf32>
    %33 = vector.shape_cast %30 : vector<1x2x128xf32> to vector<1x1x2x128xf32>
    tpu.vector_store %arg6[%c0_27, %c1_28, %c0_29, %c0_30], %33 {strides = array<i32>} : memref<1x4x2x128xf32, #tpu.memory_space<vmem>>, vector<1x1x2x128xf32>,
    %c0_31 = arith.constant 0 : index
    %c2 = arith.constant 2 : index
    %c0_32 = arith.constant 0 : index
    %c0_33 = arith.constant 0 : index
    %34 = vector.load %arg6[%c0_31, %c2, %c0_32, %c0_33] : memref<1x4x2x128xf32, #tpu.memory_space<vmem>>, vector<1x1x2x128xf32>
    %35 = vector.shape_cast %34 : vector<1x1x2x128xf32> to vector<1x2x128xf32>
    %36 = arith.addf %35, %20 : vector<1x2x128xf32>
    %c0_34 = arith.constant 0 : index
    %c2_35 = arith.constant 2 : index
    %c0_36 = arith.constant 0 : index
    %c0_37 = arith.constant 0 : index
    %37 = vector.load %arg6[%c0_34, %c2_35, %c0_36, %c0_37] : memref<1x4x2x128xf32, #tpu.memory_space<vmem>>, vector<1x1x2x128xf32>
    %38 = vector.shape_cast %37 : vector<1x1x2x128xf32> to vector<1x2x128xf32>
    %39 = vector.shape_cast %36 : vector<1x2x128xf32> to vector<1x1x2x128xf32>
    tpu.vector_store %arg6[%c0_34, %c2_35, %c0_36, %c0_37], %39 {strides = array<i32>} : memref<1x4x2x128xf32, #tpu.memory_space<vmem>>, vector<1x1x2x128xf32>,
    %c0_38 = arith.constant 0 : index
    %c3 = arith.constant 3 : index
    %c0_39 = arith.constant 0 : index
    %c0_40 = arith.constant 0 : index
    %40 = vector.load %arg6[%c0_38, %c3, %c0_39, %c0_40] : memref<1x4x2x128xf32, #tpu.memory_space<vmem>>, vector<1x1x2x128xf32>
    %41 = vector.shape_cast %40 : vector<1x1x2x128xf32> to vector<1x2x128xf32>
    %42 = arith.addf %41, %21 : vector<1x2x128xf32>
    %c0_41 = arith.constant 0 : index
    %c3_42 = arith.constant 3 : index
    %c0_43 = arith.constant 0 : index
    %c0_44 = arith.constant 0 : index
    %43 = vector.load %arg6[%c0_41, %c3_42, %c0_43, %c0_44] : memref<1x4x2x128xf32, #tpu.memory_space<vmem>>, vector<1x1x2x128xf32>
    %44 = vector.shape_cast %43 : vector<1x1x2x128xf32> to vector<1x2x128xf32>
    %45 = vector.shape_cast %42 : vector<1x2x128xf32> to vector<1x1x2x128xf32>
    tpu.vector_store %arg6[%c0_41, %c3_42, %c0_43, %c0_44], %45 {strides = array<i32>} : memref<1x4x2x128xf32, #tpu.memory_space<vmem>>, vector<1x1x2x128xf32>,
    return
  }
  func.func @transform_0(%arg0: i32, %arg1: i32, %arg2: i32) -> (i32, i32, i32, i32) {
    %c1_i32 = arith.constant 1 : i32
    %0 = arith.muli %arg1, %c1_i32 : i32
    %1 = arith.addi %0, %arg2 : i32
    %c0_i32 = arith.constant 0 : i32
    %c0_i32_0 = arith.constant 0 : i32
    %c0_i32_1 = arith.constant 0 : i32
    return %arg0, %c0_i32, %1, %c0_i32_0 : i32, i32, i32, i32
  }
  func.func @transform_1(%arg0: i32, %arg1: i32, %arg2: i32) -> (i32, i32, i32) {
    %c1_i32 = arith.constant 1 : i32
    %0 = arith.muli %arg1, %c1_i32 : i32
    %1 = arith.addi %0, %arg2 : i32
    %c0_i32 = arith.constant 0 : i32
    %c0_i32_0 = arith.constant 0 : i32
    return %arg0, %1, %c0_i32 : i32, i32, i32
  }
  func.func @transform_2(%arg0: i32, %arg1: i32, %arg2: i32) -> (i32, i32, i32, i32) {
    %c1_i32 = arith.constant 1 : i32
    %0 = arith.muli %arg1, %c1_i32 : i32
    %1 = arith.addi %0, %arg2 : i32
    %c1_i32_0 = arith.constant 1 : i32
    %c0_i32 = arith.constant 0 : i32
    %c0_i32_1 = arith.constant 0 : i32
    return %arg0, %c1_i32_0, %1, %c0_i32 : i32, i32, i32, i32
  }
  func.func @transform_3(%arg0: i32, %arg1: i32, %arg2: i32) -> (i32, i32, i32, i32) {
    %c0_i32 = arith.constant 0 : i32
    %c0_i32_0 = arith.constant 0 : i32
    %c0_i32_1 = arith.constant 0 : i32
    return %arg0, %arg1, %c0_i32, %c0_i32_0 : i32, i32, i32, i32
  }
}

</mosaic_0001>

<llo_original>
// kernel: tpu_custom_call.1
$region0: #{tpu_custom_call.1}
  #allocation0 [shape = 'u32[]', space=smem, size = 0x4, offset = 0x4, fixed_abs, tag = 'smem constant byte address 0x4 - core index']
  #allocation1 [shape = 'u32[144,128]{1,0:T(1,128)}', space=vmem, size = 0x12000, scoped, tag = 'internal scratch']
  %s0 = inlined_call_operand.hbm [shape: f32[2,2,2,128], index: 0, kind: input, shape index: {}]
  %s1 = inlined_call_operand.hbm [shape: s32[2,2,128], index: 1, kind: input, shape index: {}]
  %s2 = inlined_call_operand.hbm [shape: f32[2,2,2,128], index: 2, kind: input, shape index: {}]
  %s3 = inlined_call_operand.hbm [shape: f32[2,4,2,128], index: 3, kind: output, shape index: {}]
  %s4 = sld [smem:[#allocation0]]
  $region61: #{tpu_custom_call.1} parent=0
    _
  %s6 = ssub.s32 1, %s4
  %s7 = scalar_select 0, %s6, %s4
  $region1: #{tpu_custom_call.1} parent=0
    #allocation2 [shape = 'u8[4096]{0}', space=vmem, size = 0x1000, scoped, tag = 'input window, operand 0']
    #allocation3 [shape = 's32[2]{0}', space=sflag, size = 0x8, scoped, tag = 'scoped memory for tpu_custom_call.1']
    #allocation4 [shape = 's32[2]{0}', space=sflag, size = 0x8, scoped, tag = 'scoped memory for tpu_custom_call.1']
    #allocation5 [shape = 'u8[2048]{0}', space=vmem, size = 0x800, scoped, tag = 'input window, operand 1']
    #allocation6 [shape = 's32[2]{0}', space=sflag, size = 0x8, scoped, tag = 'scoped memory for tpu_custom_call.1']
    #allocation7 [shape = 'u8[2048]{0}', space=vmem, size = 0x800, scoped, tag = 'input window, operand 2']
    #allocation8 [shape = 'u8[8192]{0}', space=vmem, size = 0x2000, scoped, tag = 'output window, operand 0']
    %8 = vsyncpa [#allocation3], 0
    %s9 = scalar_lea.sflag [#allocation3], 1
    %10 = vsyncpa %s9, 0
    %11 = vsyncpa [#allocation6], 0
    %s12 = scalar_lea.sflag [#allocation6], 1
    %13 = vsyncpa %s12, 0
    %14 = vsyncpa [#allocation4], 0
    %s15 = scalar_lea.sflag [#allocation4], 1
    %16 = vsyncpa %s15, 0
    loop: start=0, step=1, limit=4
    $region2: #{tpu_custom_call.1} parent=1 // loop_pre_header
      _
    $region3: #{tpu_custom_call.1} parent=1 // loop_header
      %s18 = sphi 0, %s22
      %p19 = scmp.ge.s32.totalorder %s18, 4
      %s25 = sphi 0, %s44
      %s26 = sphi 0, %s40
      %s27 = sphi 0, %s36
      %s28 = sphi 0, %s25
      %s29 = sphi 0, %s26
      %s30 = sphi 0, %s27
      %s31 = sphi 0, %s28
      %s32 = sphi 0, %s29
      %s33 = sphi 0, %s30
      %s51 = sphi 0, %s53
      %s54 = sphi 0, %s51
      %s55 = sphi 0, %s54
      %s71 = sphi 0, %s55
      %s81 = sphi 0, %s83
      %s84 = sphi 0, %s81
      %s85 = sphi 0, %s84
      %s101 = sphi 0, %s85
      %s111 = sphi 0, %s113
      %s114 = sphi 0, %s111
      %s115 = sphi 0, %s114
      %s131 = sphi 0, %s115
      %s139 = sphi 0, %s141
      %s142 = sphi 0, %s139
      %s143 = sphi 0, %s142
      %s159 = sphi 0, %s143
    $region4: #{tpu_custom_call.1} parent=1 // loop_header_branch
      %21 = sbr.rel (%p19) target = $region8
    $region5: #{tpu_custom_call.1} parent=1 // loop_body
      %s23 = ssub.s32 %s18, 1
      %s24 = ssub.s32 %s18, 2
      %s34 = sadd.s32 1, %s27
      %p35 = scmp.ge.s32.totalorder %s34, 1
      %s36 = scalar_select %p35, 0, %s34
      %s37 = sadd.s32 1, %s26
      %s38 = scalar_select %p35, %s37, %s26
      %p39 = scmp.ge.s32.totalorder %s38, 1
      %s40 = scalar_select %p39, 0, %s38
      %s41 = sadd.s32 1, %s25
      %s42 = scalar_select %p39, %s41, %s25
      %p43 = scmp.ge.s32.totalorder %s42, 2
      %s44 = scalar_select %p43, 0, %s42
      %s45 = sadd.s32 %s26, %s27
      %s46 = sadd.s32 %s40, %s36
      %s47 = ssub.s32 %s25, %s44
      %s48 = ssub.s32 %s45, %s46
      %s49 = sor.u32 %s47, %s48
      %p50 = scmp.eq.s32.totalorder %s49, 0
      %s52 = sadd.s32 %s51, 1
      %s53 = scalar_select %p50, %s51, %s52
      %p56 = pneg %p50
      %p57 = scmp.eq.s32.totalorder %s18, 1
      %p58 = por %p56, %p57
      %p59 = scmp.ne.s32.totalorder %s51, %s54
      %p60 = scmp.eq.s32.totalorder %s18, 0
      %p61 = por %p59, %p60
      %p62 = scmp.ne.s32.totalorder %s51, %s54
      %p63 = scmp.eq.s32.totalorder %s23, 1
      %p64 = por %p62, %p63
      %p65 = scmp.ne.s32.totalorder %s54, %s55
      %p66 = scmp.eq.s32.totalorder %s23, 0
      %p67 = por %p65, %p66
      %p68 = scmp.ne.s32.totalorder %s54, %s55
      %p69 = scmp.eq.s32.totalorder %s24, 1
      %p70 = por %p68, %p69
      %p72 = scmp.ne.s32.totalorder %s55, %s71
      %p73 = scmp.eq.s32.totalorder %s24, 0
      %p74 = por %p72, %p73
      %s75 = sadd.s32 %s26, %s27
      %s76 = sadd.s32 %s40, %s36
      %s77 = ssub.s32 %s25, %s44
      %s78 = ssub.s32 %s75, %s76
      %s79 = sor.u32 %s77, %s78
      %p80 = scmp.eq.s32.totalorder %s79, 0
      %s82 = sadd.s32 %s81, 1
      %s83 = scalar_select %p80, %s81, %s82
      %p86 = pneg %p80
      %p87 = scmp.eq.s32.totalorder %s18, 1
      %p88 = por %p86, %p87
      %p89 = scmp.ne.s32.totalorder %s81, %s84
      %p90 = scmp.eq.s32.totalorder %s18, 0
      %p91 = por %p89, %p90
      %p92 = scmp.ne.s32.totalorder %s81, %s84
      %p93 = scmp.eq.s32.totalorder %s23, 1
      %p94 = por %p92, %p93
      %p95 = scmp.ne.s32.totalorder %s84, %s85
      %p96 = scmp.eq.s32.totalorder %s23, 0
      %p97 = por %p95, %p96
      %p98 = scmp.ne.s32.totalorder %s84, %s85
      %p99 = scmp.eq.s32.totalorder %s24, 1
      %p100 = por %p98, %p99
      %p102 = scmp.ne.s32.totalorder %s85, %s101
      %p103 = scmp.eq.s32.totalorder %s24, 0
      %p104 = por %p102, %p103
      %s105 = sadd.s32 %s26, %s27
      %s106 = sadd.s32 %s40, %s36
      %s107 = ssub.s32 %s25, %s44
      %s108 = ssub.s32 %s105, %s106
      %s109 = sor.u32 %s107, %s108
      %p110 = scmp.eq.s32.totalorder %s109, 0
      %s112 = sadd.s32 %s111, 1
      %s113 = scalar_select %p110, %s111, %s112
      %p116 = pneg %p110
      %p117 = scmp.eq.s32.totalorder %s18, 1
      %p118 = por %p116, %p117
      %p119 = scmp.ne.s32.totalorder %s111, %s114
      %p120 = scmp.eq.s32.totalorder %s18, 0
      %p121 = por %p119, %p120
      %p122 = scmp.ne.s32.totalorder %s111, %s114
      %p123 = scmp.eq.s32.totalorder %s23, 1
      %p124 = por %p122, %p123
      %p125 = scmp.ne.s32.totalorder %s114, %s115
      %p126 = scmp.eq.s32.totalorder %s23, 0
      %p127 = por %p125, %p126
      %p128 = scmp.ne.s32.totalorder %s114, %s115
      %p129 = scmp.eq.s32.totalorder %s24, 1
      %p130 = por %p128, %p129
      %p132 = scmp.ne.s32.totalorder %s115, %s131
      %p133 = scmp.eq.s32.totalorder %s24, 0
      %p134 = por %p132, %p133
      %s135 = ssub.s32 %s25, %s44
      %s136 = ssub.s32 %s26, %s40
      %s137 = sor.u32 %s135, %s136
      %p138 = scmp.eq.s32.totalorder %s137, 0
      %s140 = sadd.s32 %s139, 1
      %s141 = scalar_select %p138, %s139, %s140
      %p144 = pneg %p138
      %p145 = scmp.eq.s32.totalorder %s18, 1
      %p146 = por %p144, %p145
      %p147 = scmp.ne.s32.totalorder %s139, %s142
      %p148 = scmp.eq.s32.totalorder %s18, 0
      %p149 = por %p147, %p148
      %p150 = scmp.ne.s32.totalorder %s139, %s142
      %p151 = scmp.eq.s32.totalorder %s23, 1
      %p152 = por %p150, %p151
      %p153 = scmp.ne.s32.totalorder %s142, %s143
      %p154 = scmp.eq.s32.totalorder %s23, 0
      %p155 = por %p153, %p154
      %p156 = scmp.ne.s32.totalorder %s142, %s143
      %p157 = scmp.eq.s32.totalorder %s24, 1
      %p158 = por %p156, %p157
      %p160 = scmp.ne.s32.totalorder %s143, %s159
      %p161 = scmp.eq.s32.totalorder %s24, 0
      %p162 = por %p160, %p161
      %p163 = scmp.le.s32.totalorder 1, %s18
      %p164 = scmp.lt.s32.totalorder %s18, 3
      %p165 = pnand %p163, %p164
      %p166 = pneg %p165
      // Predicated region
      $region9: #{tpu_custom_call.1} parent=5 // pred_check
        _
      $region10: #{tpu_custom_call.1} parent=5 // pred_check_branch
        %168 = sbr.rel (%p165) target = $region12
      $region11: #{tpu_custom_call.1} parent=5 // pred_region
        %s169 = ssub.s32 %s18, 1
      $region12: #{tpu_custom_call.1} parent=5 // pred_fallthru
        _
      %p170 = scmp.lt.s32.totalorder %s18, 2
      // Predicated region
      $region13: #{tpu_custom_call.1} parent=5 // pred_check
        %p171 = pneg %p170
      $region14: #{tpu_custom_call.1} parent=5 // pred_check_branch
        %173 = sbr.rel (%p171) target = $region16
      $region15: #{tpu_custom_call.1} parent=5 // pred_region
        // Predicated region
        $region17: #{tpu_custom_call.1} parent=15 // pred_check
          %p174 = pneg %p61
        $region18: #{tpu_custom_call.1} parent=15 // pred_check_branch
          %176 = sbr.rel (%p174) target = $region20
        $region19: #{tpu_custom_call.1} parent=15 // pred_region
          %s177 = sand.u32 %s51, 1
          %s178 = scalar_lea.sflag [#allocation3], %s177
          %s179 = sand.u32 %s51, 1
          %s180 = smul.addr %s179, 4
          %s181 = scalar_lea.vmem [#allocation2], %s180
          %s182 = sadd.s32 %s26, %s27
          %s184 = ssub.s32 64, 64
          %185 = vsyncadd %s178, %s184
          %s186 = smul.addr %s25, 2
          %s187 = sadd.s32 %s182, %s186
          %s188 = smul.addr %s187, 32
          %s189 = scalar_lea.hbm %s0, %s188
          %s190 = sshll.u32 %s181, 4
          %s191 = int_to_ptr.vmem [resolvable:$true] %s190
          %196 = dma.hbm_to_vmem [thread:$0]  %s189, 64, %s191, %s178, 32, 32, 2
        $region20: #{tpu_custom_call.1} parent=15 // pred_fallthru
          _
        // Predicated region
        $region21: #{tpu_custom_call.1} parent=15 // pred_check
          %p197 = pneg %p91
        $region22: #{tpu_custom_call.1} parent=15 // pred_check_branch
          %199 = sbr.rel (%p197) target = $region24
        $region23: #{tpu_custom_call.1} parent=15 // pred_region
          %s200 = sand.u32 %s18, 1
          %s201 = scalar_lea.sflag [#allocation6], %s200
          %s202 = sand.u32 %s81, 1
          %s203 = smul.addr %s202, 2
          %s204 = scalar_lea.vmem [#allocation5], %s203
          %s205 = sadd.s32 %s26, %s27
          %s207 = ssub.s32 32, 32
          %208 = vsyncadd %s201, %s207
          %s209 = sadd.s32 %s205, %s25
          %s210 = smul.addr %s209, 32
          %s211 = scalar_lea.hbm %s1, %s210
          %s213 = sshll.u32 %s204, 4
          %s214 = int_to_ptr.vmem [resolvable:$true] %s213
          %216 = dma.hbm_to_vmem [thread:$0]  %s211, 32, %s214, %s201
        $region24: #{tpu_custom_call.1} parent=15 // pred_fallthru
          _
        // Predicated region
        $region25: #{tpu_custom_call.1} parent=15 // pred_check
          %p217 = pneg %p121
        $region26: #{tpu_custom_call.1} parent=15 // pred_check_branch
          %219 = sbr.rel (%p217) target = $region28
        $region27: #{tpu_custom_call.1} parent=15 // pred_region
          %s220 = sand.u32 %s18, 1
          %s221 = scalar_lea.sflag [#allocation6], %s220
          %s222 = sand.u32 %s111, 1
          %s223 = smul.addr %s222, 2
          %s224 = scalar_lea.vmem [#allocation7], %s223
          %s225 = sadd.s32 %s26, %s27
          %s227 = ssub.s32 32, 32
          %228 = vsyncadd %s221, %s227
          %s229 = sadd.s32 %s225, 1
          %s230 = smul.addr %s25, 2
          %s231 = sadd.s32 %s229, %s230
          %s232 = smul.addr %s231, 32
          %s233 = scalar_lea.hbm %s2, %s232
          %s235 = sshll.u32 %s224, 4
          %s236 = int_to_ptr.vmem [resolvable:$true] %s235
          %238 = dma.hbm_to_vmem [thread:$0]  %s233, 32, %s236, %s221
        $region28: #{tpu_custom_call.1} parent=15 // pred_fallthru
          _
      $region16: #{tpu_custom_call.1} parent=5 // pred_fallthru
        _
      %p239 = scmp.le.s32.totalorder 1, %s18
      %p240 = scmp.lt.s32.totalorder %s18, 3
      %p241 = pnand %p239, %p240
      %p242 = pneg %p241
      // Predicated region
      $region29: #{tpu_custom_call.1} parent=5 // pred_check
        _
      $region30: #{tpu_custom_call.1} parent=5 // pred_check_branch
        %244 = sbr.rel (%p241) target = $region32
      $region31: #{tpu_custom_call.1} parent=5 // pred_region
        %s245 = ssub.s32 %s18, 1
        %s246 = sand.u32 %s54, 1
        %s247 = scalar_lea.sflag [#allocation3], %s246
        %s248 = sand.u32 %s54, 1
        %s249 = smul.addr %s248, 4
        %s250 = scalar_lea.vmem [#allocation2], %s249
        // Predicated region
        $region33: #{tpu_custom_call.1} parent=31 // pred_check
          %p251 = pneg %p67
        $region34: #{tpu_custom_call.1} parent=31 // pred_check_branch
          %253 = sbr.rel (%p251) target = $region36
        $region35: #{tpu_custom_call.1} parent=31 // pred_region
          %254 = dma.done %s247, 64
        $region36: #{tpu_custom_call.1} parent=31 // pred_fallthru
          _
        %s255 = sand.u32 %s23, 1
        %s256 = scalar_lea.sflag [#allocation6], %s255
        %s257 = sand.u32 %s84, 1
        %s258 = smul.addr %s257, 2
        %s259 = scalar_lea.vmem [#allocation5], %s258
        // Predicated region
        $region37: #{tpu_custom_call.1} parent=31 // pred_check
          %p260 = pneg %p97
        $region38: #{tpu_custom_call.1} parent=31 // pred_check_branch
          %262 = sbr.rel (%p260) target = $region40
        $region39: #{tpu_custom_call.1} parent=31 // pred_region
          %263 = dma.done %s256, 32
        $region40: #{tpu_custom_call.1} parent=31 // pred_fallthru
          _
        %s264 = sand.u32 %s23, 1
        %s265 = scalar_lea.sflag [#allocation6], %s264
        %s266 = sand.u32 %s114, 1
        %s267 = smul.addr %s266, 2
        %s268 = scalar_lea.vmem [#allocation7], %s267
        // Predicated region
        $region41: #{tpu_custom_call.1} parent=31 // pred_check
          %p269 = pneg %p127
        $region42: #{tpu_custom_call.1} parent=31 // pred_check_branch
          %271 = sbr.rel (%p269) target = $region44
        $region43: #{tpu_custom_call.1} parent=31 // pred_region
          %272 = dma.done %s265, 32
        $region44: #{tpu_custom_call.1} parent=31 // pred_fallthru
          _
        %s273 = sand.u32 %s54, 1
        %s274 = scalar_lea.sflag [#allocation3], %s273
        %s275 = sand.u32 %s54, 1
        %s276 = smul.addr %s275, 4
        %s277 = scalar_lea.vmem [#allocation2], %s276
        %p278 = pneg %p67
        %p279 = pneg %p64
        %s280 = sand.u32 %s23, 1
        %s281 = scalar_lea.sflag [#allocation6], %s280
        %s282 = sand.u32 %s84, 1
        %s283 = smul.addr %s282, 2
        %s284 = scalar_lea.vmem [#allocation5], %s283
        %p285 = pneg %p97
        %p286 = pneg %p94
        %s287 = sand.u32 %s23, 1
        %s288 = scalar_lea.sflag [#allocation6], %s287
        %s289 = sand.u32 %s114, 1
        %s290 = smul.addr %s289, 2
        %s291 = scalar_lea.vmem [#allocation7], %s290
        %p292 = pneg %p127
        %p293 = pneg %p124
        %p294 = pneg %p155
        %p295 = pneg %p152
        %s296 = sand.u32 %s142, 1
        %s297 = scalar_lea.sflag [#allocation4], %s296
        %s298 = sand.u32 %s142, 1
        %s299 = smul.addr %s298, 8
        %s300 = scalar_lea.vmem [#allocation8], %s299
        %s301 = sadd.s32 %s29, %s30
        %s302 = sadd.s32 %s29, %s30
        %s303 = sadd.s32 %s29, %s30
        %s304 = smul.u32 4, %s29
        %p305 = scmp.eq.s32.totalorder %s30, 0
        // Predicated region
        $region45: #{tpu_custom_call.1} parent=31 // pred_check
          %p306 = pneg %p305
        $region46: #{tpu_custom_call.1} parent=31 // pred_check_branch
          %308 = sbr.rel (%p306) target = $region48
        $region47: #{tpu_custom_call.1} parent=31 // pred_region
          %309 = vst [vmem:[%s300] sm:$0x3] 0.0
          %310 = vst [vmem:[%s300 + $0x2] sm:$0x3] 0.0
          %311 = vst [vmem:[%s300 + $0x4] sm:$0x3] 0.0
          %312 = vst [vmem:[%s300 + $0x6] sm:$0x3] 0.0
        $region48: #{tpu_custom_call.1} parent=31 // pred_fallthru
          _
        %v313 = vld [vmem:[%s250] sm:$0x3]
        %s314 = scalar_lea.vmem %s250, 2 [#allocation2]
        %v315 = vld [vmem:[%s314] sm:$0x3]
        %v316 = vld [vmem:[%s259] sm:$0x3]
        %v317 = vld [vmem:[%s268] sm:$0x3]
        %v318 = vsub.f32 %v313, %v315
        %v319 = vmul.f32 %v318, 1.442695
        %v320 = vpow.pop %v319
        %v321 = vadd.f32 %v320, 1.0
        %v322 = vrcp.pop %v321
        %v323 = vmul.f32 1.0, %v322
        %vm324 = vcmp.eq.s32.totalorder %v316, 1
        %v325 = vsel %vm324, 1, 0
        %v326 = vcvt.s32.f32 %v325
        %v327 = vmul.f32 %v323, %v326
        %v328 = vmul.f32 %v323, %v317
        %v329 = vld [vmem:[%s300] sm:$0x3]
        %v330 = vadd.f32 %v329, %v326
        %331 = vst [vmem:[%s300] sm:$0x3] %v330
        %s332 = scalar_lea.vmem %s300, 2 [#allocation8]
        %v333 = vld [vmem:[%s332] sm:$0x3]
        %v334 = vadd.f32 %v333, %v323
        %335 = vst [vmem:[%s332] sm:$0x3] %v334
        %s336 = scalar_lea.vmem %s300, 4 [#allocation8]
        %v337 = vld [vmem:[%s336] sm:$0x3]
        %v338 = vadd.f32 %v337, %v327
        %339 = vst [vmem:[%s336] sm:$0x3] %v338
        %s340 = scalar_lea.vmem %s300, 6 [#allocation8]
        %v341 = vld [vmem:[%s340] sm:$0x3]
        %v342 = vadd.f32 %v341, %v328
        %343 = vst [vmem:[%s340] sm:$0x3] %v342
        %s344 = sand.u32 %s142, 1
        %s345 = scalar_lea.sflag [#allocation4], %s344
        %s346 = sand.u32 %s142, 1
        %s347 = smul.addr %s346, 8
        %s348 = scalar_lea.vmem [#allocation8], %s347
        // Predicated region
        $region49: #{tpu_custom_call.1} parent=31 // pred_check
          %p349 = pneg %p152
        $region50: #{tpu_custom_call.1} parent=31 // pred_check_branch
          %351 = sbr.rel (%p349) target = $region52
        $region51: #{tpu_custom_call.1} parent=31 // pred_region
          %s352 = smul.u32 4, %s29
          %s354 = ssub.s32 128, 128
          %355 = vsyncadd %s345, %s354
          %s356 = smul.addr %s28, 4
          %s357 = sadd.s32 %s352, %s356
          %s358 = smul.addr %s357, 32
          %s359 = scalar_lea.hbm %s3, %s358
          %s360 = sshll.u32 %s348, 4
          %s361 = int_to_ptr.vmem [resolvable:$true] %s360
          %366 = dma.vmem_to_hbm [thread:$0]  %s361, 128, %s359, %s345, 32, 32, 2
        $region52: #{tpu_custom_call.1} parent=31 // pred_fallthru
          _
      $region32: #{tpu_custom_call.1} parent=5 // pred_fallthru
        _
      %p367 = scmp.le.s32.totalorder 2, %s18
      // Predicated region
      $region53: #{tpu_custom_call.1} parent=5 // pred_check
        %p368 = pneg %p367
      $region54: #{tpu_custom_call.1} parent=5 // pred_check_branch
        %370 = sbr.rel (%p368) target = $region56
      $region55: #{tpu_custom_call.1} parent=5 // pred_region
        %s371 = ssub.s32 %s18, 2
        // Predicated region
        $region57: #{tpu_custom_call.1} parent=55 // pred_check
          %p372 = pneg %p158
        $region58: #{tpu_custom_call.1} parent=55 // pred_check_branch
          %374 = sbr.rel (%p372) target = $region60
        $region59: #{tpu_custom_call.1} parent=55 // pred_region
          %s375 = sand.u32 %s143, 1
          %s376 = scalar_lea.sflag [#allocation4], %s375
          %s377 = sand.u32 %s143, 1
          %s378 = smul.addr %s377, 8
          %s379 = scalar_lea.vmem [#allocation8], %s378
          %380 = dma.done %s376, 128
        $region60: #{tpu_custom_call.1} parent=55 // pred_fallthru
          _
      $region56: #{tpu_custom_call.1} parent=5 // pred_fallthru
        _
    $region6: #{tpu_custom_call.1} parent=1 // loop_footer
      %s22 = sadd.s32 1, %s18
    $region7: #{tpu_custom_call.1} parent=1 // loop_footer_branch
      %17 = sbr.rel target = $region3
    $region8: #{tpu_custom_call.1} parent=1 // loop_exit
      _
    %381 = vsyncpa [#allocation3], 1
    %s382 = scalar_lea.sflag [#allocation3], 1
    %383 = vsyncpa %s382, 1
    %384 = vsyncpa [#allocation6], 1
    %s385 = scalar_lea.sflag [#allocation6], 1
    %386 = vsyncpa %s385, 1
    %387 = vsyncpa [#allocation4], 1
    %s388 = scalar_lea.sflag [#allocation4], 1
    %389 = vsyncpa %s388, 1

</llo_original>
